<compile_context>
chip_gen: v7x
topology: tpu7x:2x2x1
jax: 0.10.0
libtpu: 0.0.40
codegen_flags: <defaults>
</compile_context>

<pallas_src>
import functools

import jax
import jax.numpy as jnp
from jax import lax
from jax.experimental import pallas as pl
from jax.experimental.pallas import tpu as pltpu

_LANES = 128
_SUBLANES = 8
_MAX_TILE_ROWS = 2048   # (2048, 128) f32 block = 1 MiB per input block


def _round_up(x, m):
    return ((x + m - 1) // m) * m


def _megacore_slices():
    """2-way split of the tile axis only where it maps onto 2 TensorCores."""
    try:
        kind = jax.devices()[0].device_kind.lower()
    except Exception:
        return 1
    # v4 / v5p megacore and v7x have 2 TensorCores per Pallas device; v5e/v6e
    # have 1, so a "parallel" split would just run sequentially and an odd
    # split would add a fully-masked duplicate tile (wasted DMA).
    return 2 if any(tag in kind for tag in ("v4", "v5p", "v7")) else 1


def _charbonnier_partial_kernel(ip_ref, tgt_ref, out_ref, *, eps2, tile_rows,
                                tiles_per_slice, tiles_total, n_real):
    c = pl.program_id(0)   # slice ("parallel") axis
    j = pl.program_id(1)   # reduction ("arbitrary") axis

    @pl.when(j == 0)
    def _():
        out_ref[...] = jnp.zeros_like(out_ref)

    d = ip_ref[...].astype(jnp.float32) - tgt_ref[...].astype(jnp.float32)

    def _accumulate(term):
        # Fold (tile_rows, 128) -> (8, 128) with pure VPU adds; the single full
        # cross-lane/sublane reduce happens once in the wrapper.
        folded = term.reshape(tile_rows // _SUBLANES, _SUBLANES, _LANES).sum(axis=0)
        out_ref[...] += folded.reshape(1, _SUBLANES, _LANES)

    logical_tile = c * tiles_per_slice + j
    # Only the last real tile (tail padding / partial boundary block) and
    # clamped duplicate tiles from an uneven 2-way split can contain invalid
    # elements; every interior tile takes the mask-free fast path.
    needs_mask = logical_tile >= tiles_total - 1

    @pl.when(jnp.logical_not(needs_mask))
    def _():
        _accumulate(jnp.sqrt(d * d + jnp.float32(eps2)))

    @pl.when(needs_mask)
    def _():
        row = lax.broadcasted_iota(jnp.int32, (tile_rows, _LANES), 0)
        lane = lax.broadcasted_iota(jnp.int32, (tile_rows, _LANES), 1)
        gidx = logical_tile * (tile_rows * _LANES) + row * _LANES + lane
        valid = gidx < n_real
        # Zero invalid inputs *before* the sqrt so boundary-block garbage can
        # never produce NaN/Inf, then zero the masked terms.
        d_m = jnp.where(valid, d, jnp.float32(0.0))
        term = jnp.sqrt(d_m * d_m + jnp.float32(eps2))
        _accumulate(jnp.where(valid, term, jnp.float32(0.0)))


def charbonnier_loss(ip, target, eps=0.001):
    """Equivalent of Loss_fn.forward: mean(sqrt((ip - target)^2 + eps^2))."""
    assert ip.shape == target.shape
    n_real = ip.size
    assert n_real > 0
    # The flat-index mask is computed in int32 (with headroom for duplicates).
    assert n_real < 2**31 - 2 * _MAX_TILE_ROWS * _LANES

    ip_flat = jnp.ravel(ip)
    tgt_flat = jnp.ravel(target)

    # Lane-dense [rows, 128] layout. Lane-aligned sizes (typical image
    # tensors) are a zero-copy reshape; otherwise pad <=127 elements. Small
    # inputs additionally round the row count to a sublane multiple (<=1023
    # extra elements on a <~1 MiB array) so the kernel keeps one uniform
    # (r/8, 8, 128) fold path.
    n_padded = _round_up(n_real, _LANES)
    if n_padded // _LANES < _MAX_TILE_ROWS and (n_padded // _LANES) % _SUBLANES:
        n_padded = _round_up(n_real, _SUBLANES * _LANES)
    n_pad = n_padded - n_real
    if n_pad:
        ip_flat = jnp.pad(ip_flat, (0, n_pad))
        tgt_flat = jnp.pad(tgt_flat, (0, n_pad))
    # TODO(synk): for huge non-lane-aligned inputs the jnp.pad above is a full
    # HBM copy; if that ever matters, sum the <128-element tail with plain jnp
    # and run the kernel on the aligned body only.

    rows = n_padded // _LANES
    ip2d = ip_flat.reshape(rows, _LANES)
    tgt2d = tgt_flat.reshape(rows, _LANES)

    tile_rows = min(_MAX_TILE_ROWS, rows)     # multiple of 8 by construction
    tiles_total = pl.cdiv(rows, tile_rows)

    num_slices = _megacore_slices() if tiles_total >= 2 else 1
    tiles_per_slice = pl.cdiv(tiles_total, num_slices)
    max_tile = tiles_total - 1

    def in_index(c, j):
        lt = c * tiles_per_slice + j
        # Clamp so the DMA always stays inside the array; clamped duplicate
        # tiles are fully masked out inside the kernel.
        return (jnp.minimum(lt, max_tile), 0)

    kernel = functools.partial(
        _charbonnier_partial_kernel,
        eps2=float(eps) * float(eps),
        tile_rows=tile_rows,
        tiles_per_slice=tiles_per_slice,
        tiles_total=tiles_total,
        n_real=n_real,
    )

    partials = pl.pallas_call(
        kernel,
        out_shape=jax.ShapeDtypeStruct((num_slices, _SUBLANES, _LANES),
                                       jnp.float32),
        grid=(num_slices, tiles_per_slice),
        in_specs=[
            pl.BlockSpec((tile_rows, _LANES), in_index),
            pl.BlockSpec((tile_rows, _LANES), in_index),
        ],
        out_specs=pl.BlockSpec((1, _SUBLANES, _LANES), lambda c, j: (c, 0, 0)),
        compiler_params=pltpu.CompilerParams(
            dimension_semantics=("parallel", "arbitrary")),
    )(ip2d, tgt2d)

    # Single tiny cross-lane/sublane reduce over num_slices * 8 * 128 partials.
    return jnp.sum(partials) / jnp.float32(n_real)


def _reference(ip, target, eps=0.001):
    diff = ip.astype(jnp.float32) - target.astype(jnp.float32)
    return jnp.mean(jnp.sqrt(diff * diff + jnp.float32(eps) * jnp.float32(eps)))


if __name__ == "__main__":
    key = jax.random.PRNGKey(0)

    # Main example: small NCHW shape consistent with an image-restoration loss.
    k1, k2 = jax.random.split(key)
    ip = jax.random.normal(k1, (2, 4, 16, 16), dtype=jnp.float32)
    target = jax.random.normal(k2, (2, 4, 16, 16), dtype=jnp.float32)
    loss = charbonnier_loss(ip, target, eps=0.001)
    jax.block_until_ready(loss)
    ref = _reference(ip, target, eps=0.001)
    assert jnp.allclose(loss, ref, rtol=1e-5, atol=1e-6), (loss, ref)

    # Unaligned size: exercises the tail-pad + in-kernel masking path.
    k3, k4 = jax.random.split(k1)
    ip_u = jax.random.normal(k3, (3, 5, 7, 11), dtype=jnp.float32)
    tgt_u = jax.random.normal(k4, (3, 5, 7, 11), dtype=jnp.float32)
    loss_u = charbonnier_loss(ip_u, tgt_u, eps=0.001)
    jax.block_until_ready(loss_u)
    ref_u = _reference(ip_u, tgt_u, eps=0.001)
    assert jnp.allclose(loss_u, ref_u, rtol=1e-5, atol=1e-6), (loss_u, ref_u)

    # Multi-tile size: exercises fast-path interior tiles, the masked last
    # tile, accumulation across the reduction axis, and (on 2-TC chips) the
    # 2-way slice split.
    k5, k6 = jax.random.split(k3)
    ip_l = jax.random.normal(k5, (4, 8, 128, 128), dtype=jnp.float32)
    tgt_l = jax.random.normal(k6, (4, 8, 128, 128), dtype=jnp.float32)
    loss_l = charbonnier_loss(ip_l, tgt_l, eps=0.001)
    jax.block_until_ready(loss_l)
    ref_l = _reference(ip_l, tgt_l, eps=0.001)
    assert jnp.allclose(loss_l, ref_l, rtol=1e-5, atol=1e-6), (loss_l, ref_l)

    print("KERNEL_OK")
</pallas_src>

<mosaic_0001>
module attributes {stable_mosaic.version = 11 : i64} {
  func.func @_charbonnier_partial_kernel(%arg0: i32, %arg1: i32, %arg2: memref<16x128xf32, #tpu.memory_space<vmem>>, %arg3: memref<16x128xf32, #tpu.memory_space<vmem>>, %arg4: memref<1x8x128xf32, #tpu.memory_space<vmem>>) attributes {dimension_semantics = [#tpu.dimension_semantics<parallel>, #tpu.dimension_semantics<arbitrary>], iteration_bounds = array<i64: 1, 1>, scalar_prefetch = 0 : i64, scratch_operands = 0 : i64, tpu.core_type = #tpu.core_type<tc>, window_params = [{transform_indices = @transform_0, window_bounds = array<i64: 16, 128>}, {transform_indices = @transform_1, window_bounds = array<i64: 16, 128>}, {transform_indices = @transform_2, window_bounds = array<i64: 1, 8, 128>}]} {
    %c0_i32 = arith.constant 0 : i32
    %0 = arith.cmpi eq, %arg1, %c0_i32 : i32
    %1 = arith.extui %0 : i1 to i32
    %c0_i32_0 = arith.constant 0 : i32
    %2 = arith.cmpi ne, %1, %c0_i32_0 : i32
    scf.if %2 {
      %cst = arith.constant 0.000000e+00 : f32
      %14 = vector.broadcast %cst : f32 to vector<1x8x128xf32>
      %c0_7 = arith.constant 0 : index
      %c0_8 = arith.constant 0 : index
      %c0_9 = arith.constant 0 : index
      %15 = vector.load %arg4[%c0_7, %c0_8, %c0_9] : memref<1x8x128xf32, #tpu.memory_space<vmem>>, vector<1x8x128xf32>
      tpu.vector_store %arg4[%c0_7, %c0_8, %c0_9], %14 {strides = array<i32>} : memref<1x8x128xf32, #tpu.memory_space<vmem>>, vector<1x8x128xf32>,
    } else {
    }
    %c0 = arith.constant 0 : index
    %c0_1 = arith.constant 0 : index
    %3 = vector.load %arg2[%c0, %c0_1] : memref<16x128xf32, #tpu.memory_space<vmem>>, vector<16x128xf32>
    %c0_2 = arith.constant 0 : index
    %c0_3 = arith.constant 0 : index
    %4 = vector.load %arg3[%c0_2, %c0_3] : memref<16x128xf32, #tpu.memory_space<vmem>>, vector<16x128xf32>
    %5 = arith.subf %3, %4 : vector<16x128xf32>
    %c1_i32 = arith.constant 1 : i32
    %6 = arith.muli %arg0, %c1_i32 : i32
    %7 = arith.addi %6, %arg1 : i32
    %c0_i32_4 = arith.constant 0 : i32
    %8 = arith.cmpi sge, %7, %c0_i32_4 : i32
    %true = arith.constant true
    %9 = arith.xori %8, %true : i1
    %10 = arith.extui %9 : i1 to i32
    %c0_i32_5 = arith.constant 0 : i32
    %11 = arith.cmpi ne, %10, %c0_i32_5 : i32
    scf.if %11 {
      %14 = arith.mulf %5, %5 : vector<16x128xf32>
      %cst = arith.constant 9.99999997E-7 : f32
      %15 = vector.broadcast %cst : f32 to vector<16x128xf32>
      %16 = arith.addf %14, %15 : vector<16x128xf32>
      %17 = math.sqrt %16 : vector<16x128xf32>
      %18 = vector.shape_cast %17 : vector<16x128xf32> to vector<2x8x128xf32>
      %cst_7 = arith.constant dense<0.000000e+00> : vector<8x128xf32>
      %19 = vector.multi_reduction <add>, %18, %cst_7 [0] : vector<2x8x128xf32> to vector<8x128xf32>
      %c0_8 = arith.constant 0 : index
      %c0_9 = arith.constant 0 : index
      %c0_10 = arith.constant 0 : index
      %20 = vector.load %arg4[%c0_8, %c0_9, %c0_10] : memref<1x8x128xf32, #tpu.memory_space<vmem>>, vector<1x8x128xf32>
      %21 = vector.shape_cast %19 : vector<8x128xf32> to vector<1x8x128xf32>
      %22 = arith.addf %20, %21 : vector<1x8x128xf32>
      %c0_11 = arith.constant 0 : index
      %c0_12 = arith.constant 0 : index
      %c0_13 = arith.constant 0 : index
      %23 = vector.load %arg4[%c0_11, %c0_12, %c0_13] : memref<1x8x128xf32, #tpu.memory_space<vmem>>, vector<1x8x128xf32>
      tpu.vector_store %arg4[%c0_11, %c0_12, %c0_13], %22 {strides = array<i32>} : memref<1x8x128xf32, #tpu.memory_space<vmem>>, vector<1x8x128xf32>,
    } else {
    }
    %12 = arith.extui %8 : i1 to i32
    %c0_i32_6 = arith.constant 0 : i32
    %13 = arith.cmpi ne, %12, %c0_i32_6 : i32
    scf.if %13 {
      %14 = tpu.iota {dimensions = array<i32: 0>} : vector<16x128xi32>
      %15 = tpu.iota {dimensions = array<i32: 1>} : vector<16x128xi32>
      %c2048_i32 = arith.constant 2048 : i32
      %16 = arith.muli %7, %c2048_i32 : i32
      %c128_i32 = arith.constant 128 : i32
      %17 = vector.broadcast %c128_i32 : i32 to vector<16x128xi32>
      %18 = arith.muli %14, %17 : vector<16x128xi32>
      %19 = vector.broadcast %16 : i32 to vector<16x128xi32>
      %20 = arith.addi %19, %18 : vector<16x128xi32>
      %21 = arith.addi %20, %15 : vector<16x128xi32>
      %c2048_i32_7 = arith.constant 2048 : i32
      %22 = vector.broadcast %c2048_i32_7 : i32 to vector<16x128xi32>
      %23 = arith.cmpi slt, %21, %22 : vector<16x128xi32>
      %cst = arith.constant 0.000000e+00 : f32
      %24 = vector.broadcast %cst : f32 to vector<16x128xf32>
      %25 = arith.select %23, %5, %24 : vector<16x128xi1>, vector<16x128xf32>
      %26 = arith.mulf %25, %25 : vector<16x128xf32>
      %cst_8 = arith.constant 9.99999997E-7 : f32
      %27 = vector.broadcast %cst_8 : f32 to vector<16x128xf32>
      %28 = arith.addf %26, %27 : vector<16x128xf32>
      %29 = math.sqrt %28 : vector<16x128xf32>
      %cst_9 = arith.constant 0.000000e+00 : f32
      %30 = vector.broadcast %cst_9 : f32 to vector<16x128xf32>
      %31 = arith.select %23, %29, %30 : vector<16x128xi1>, vector<16x128xf32>
      %32 = vector.shape_cast %31 : vector<16x128xf32> to vector<2x8x128xf32>
      %cst_10 = arith.constant dense<0.000000e+00> : vector<8x128xf32>
      %33 = vector.multi_reduction <add>, %32, %cst_10 [0] : vector<2x8x128xf32> to vector<8x128xf32>
      %c0_11 = arith.constant 0 : index
      %c0_12 = arith.constant 0 : index
      %c0_13 = arith.constant 0 : index
      %34 = vector.load %arg4[%c0_11, %c0_12, %c0_13] : memref<1x8x128xf32, #tpu.memory_space<vmem>>, vector<1x8x128xf32>
      %35 = vector.shape_cast %33 : vector<8x128xf32> to vector<1x8x128xf32>
      %36 = arith.addf %34, %35 : vector<1x8x128xf32>
      %c0_14 = arith.constant 0 : index
      %c0_15 = arith.constant 0 : index
      %c0_16 = arith.constant 0 : index
      %37 = vector.load %arg4[%c0_14, %c0_15, %c0_16] : memref<1x8x128xf32, #tpu.memory_space<vmem>>, vector<1x8x128xf32>
      tpu.vector_store %arg4[%c0_14, %c0_15, %c0_16], %36 {strides = array<i32>} : memref<1x8x128xf32, #tpu.memory_space<vmem>>, vector<1x8x128xf32>,
    } else {
    }
    return
  }
  func.func @transform_0(%arg0: i32, %arg1: i32) -> (i32, i32) {
    %c1_i32 = arith.constant 1 : i32
    %0 = arith.muli %arg0, %c1_i32 : i32
    %1 = arith.addi %0, %arg1 : i32
    %c0_i32 = arith.constant 0 : i32
    %2 = arith.minsi %1, %c0_i32 : i32
    %c0_i32_0 = arith.constant 0 : i32
    %c0_i32_1 = arith.constant 0 : i32
    return %2, %c0_i32_0 : i32, i32
  }
  func.func @transform_1(%arg0: i32, %arg1: i32) -> (i32, i32) {
    %c1_i32 = arith.constant 1 : i32
    %0 = arith.muli %arg0, %c1_i32 : i32
    %1 = arith.addi %0, %arg1 : i32
    %c0_i32 = arith.constant 0 : i32
    %2 = arith.minsi %1, %c0_i32 : i32
    %c0_i32_0 = arith.constant 0 : i32
    %c0_i32_1 = arith.constant 0 : i32
    return %2, %c0_i32_0 : i32, i32
  }
  func.func @transform_2(%arg0: i32, %arg1: i32) -> (i32, i32, i32) {
    %c0_i32 = arith.constant 0 : i32
    %c0_i32_0 = arith.constant 0 : i32
    %c0_i32_1 = arith.constant 0 : i32
    return %arg0, %c0_i32, %c0_i32_0 : i32, i32, i32
  }
}

</mosaic_0001>

<llo_original>
// kernel: tpu_custom_call.1
$region0: #{tpu_custom_call.1}
  #allocation0 [shape = 'u32[]', space=smem, size = 0x4, offset = 0x4, fixed_abs, tag = 'smem constant byte address 0x4 - core index']
  #allocation1 [shape = 'u32[144,128]{1,0:T(1,128)}', space=vmem, size = 0x12000, scoped, tag = 'internal scratch']
  %s0 = inlined_call_operand.hbm [shape: f32[16,128], index: 0, kind: input, shape index: {}]
  %s1 = inlined_call_operand.hbm [shape: f32[16,128], index: 1, kind: input, shape index: {}]
  %s2 = inlined_call_operand.hbm [shape: f32[1,8,128], index: 2, kind: output, shape index: {}]
  %s3 = sld [smem:[#allocation0]]
  $region38: #{tpu_custom_call.1} parent=0
    _
  %s5 = ssub.s32 1, %s3
  %s6 = scalar_select 0, %s5, %s3
  $region1: #{tpu_custom_call.1} parent=0
    #allocation2 [shape = 'u8[8192]{0}', space=vmem, size = 0x2000, scoped, tag = 'input window, operand 0, single buffered']
    #allocation3 [shape = 's32[1]{0}', space=sflag, size = 0x4, scoped, tag = 'scoped memory for tpu_custom_call.1']
    #allocation4 [shape = 's32[1]{0}', space=sflag, size = 0x4, scoped, tag = 'scoped memory for tpu_custom_call.1']
    #allocation5 [shape = 'u8[8192]{0}', space=vmem, size = 0x2000, scoped, tag = 'input window, operand 1, single buffered']
    #allocation6 [shape = 's32[1]{0}', space=sflag, size = 0x4, scoped, tag = 'scoped memory for tpu_custom_call.1']
    #allocation7 [shape = 'u8[4096]{0}', space=vmem, size = 0x1000, scoped, tag = 'output window, operand 0, single buffered']
    %7 = vsyncpa [#allocation3], 0
    %8 = vsyncpa [#allocation6], 0
    %9 = vsyncpa [#allocation4], 0
    // Predicated region
    $region2: #{tpu_custom_call.1} parent=1 // pred_check
      _
    $region3: #{tpu_custom_call.1} parent=1 // pred_check_branch
      %11 = sbr.rel (0) target = $region5
    $region4: #{tpu_custom_call.1} parent=1 // pred_region
      %s12 = sadd.s32 0, 0
      %p13 = scmp.lt.s32.totalorder %s12, 0
      %s14 = scalar_select %p13, %s12, 0
      %s15 = smul.u32 2, %s14
      %s17 = ssub.s32 256, 256
      %18 = vsyncadd [#allocation3], %s17
      %s19 = smul.addr %s15, 128
      %s20 = scalar_lea.hbm %s0, %s19
      %s21 = sshll.u32 [#allocation2], 4
      %s22 = int_to_ptr.vmem [resolvable:$true] %s21
      %27 = dma.hbm_to_vmem [thread:$0]  %s20, 256, %s22, [#allocation3], 128, 128, 8
    $region5: #{tpu_custom_call.1} parent=1 // pred_fallthru
      _
    // Predicated region
    $region6: #{tpu_custom_call.1} parent=1 // pred_check
      _
    $region7: #{tpu_custom_call.1} parent=1 // pred_check_branch
      %29 = sbr.rel (0) target = $region9
    $region8: #{tpu_custom_call.1} parent=1 // pred_region
      %s30 = sadd.s32 0, 0
      %p31 = scmp.lt.s32.totalorder %s30, 0
      %s32 = scalar_select %p31, %s30, 0
      %s33 = smul.u32 2, %s32
      %s35 = ssub.s32 256, 256
      %36 = vsyncadd [#allocation6], %s35
      %s37 = smul.addr %s33, 128
      %s38 = scalar_lea.hbm %s1, %s37
      %s39 = sshll.u32 [#allocation5], 4
      %s40 = int_to_ptr.vmem [resolvable:$true] %s39
      %45 = dma.hbm_to_vmem [thread:$0]  %s38, 256, %s40, [#allocation6], 128, 128, 8
    $region9: #{tpu_custom_call.1} parent=1 // pred_fallthru
      _
    // Predicated region
    $region10: #{tpu_custom_call.1} parent=1 // pred_check
      _
    $region11: #{tpu_custom_call.1} parent=1 // pred_check_branch
      %47 = sbr.rel (0) target = $region13
    $region12: #{tpu_custom_call.1} parent=1 // pred_region
      %48 = dma.done [#allocation3], 256
    $region13: #{tpu_custom_call.1} parent=1 // pred_fallthru
      _
    // Predicated region
    $region14: #{tpu_custom_call.1} parent=1 // pred_check
      _
    $region15: #{tpu_custom_call.1} parent=1 // pred_check_branch
      %50 = sbr.rel (0) target = $region17
    $region16: #{tpu_custom_call.1} parent=1 // pred_region
      %51 = dma.done [#allocation6], 256
    $region17: #{tpu_custom_call.1} parent=1 // pred_fallthru
      _
    %s52 = sadd.s32 0, 0
    %p53 = scmp.lt.s32.totalorder %s52, 0
    %s54 = scalar_select %p53, %s52, 0
    %s55 = smul.u32 2, %s54
    %s56 = sadd.s32 0, 0
    %p57 = scmp.lt.s32.totalorder %s56, 0
    %s58 = scalar_select %p57, %s56, 0
    %s59 = smul.u32 2, %s58
    %p60 = scmp.eq.s32.totalorder 0, 0
    // Predicated region
    $region18: #{tpu_custom_call.1} parent=1 // pred_check
      %p61 = pneg %p60
    $region19: #{tpu_custom_call.1} parent=1 // pred_check_branch
      %63 = sbr.rel (%p61) target = $region21
    $region20: #{tpu_custom_call.1} parent=1 // pred_region
      %64 = vst [vmem:[#allocation7] sm:$0xff] 0.0
    $region21: #{tpu_custom_call.1} parent=1 // pred_fallthru
      _
    %v65 = vld [vmem:[#allocation2] sm:$0xff]
    %v66 = vld [vmem:[#allocation2 + $0x8] sm:$0xff]
    %v67 = vld [vmem:[#allocation5] sm:$0xff]
    %v68 = vld [vmem:[#allocation5 + $0x8] sm:$0xff]
    %v69 = vsub.f32 %v65, %v67
    %v70 = vsub.f32 %v66, %v68
    %s71 = sadd.s32 0, 0
    %p72 = scmp.ge.s32.totalorder %s71, 0
    %p73 = scmp.lt.s32.totalorder %s71, 0
    // Predicated region
    $region22: #{tpu_custom_call.1} parent=1 // pred_check
      %p74 = pneg %p73
    $region23: #{tpu_custom_call.1} parent=1 // pred_check_branch
      %76 = sbr.rel (%p74) target = $region25
    $region24: #{tpu_custom_call.1} parent=1 // pred_region
      %v77 = vmul.f32 %v69, %v69
      %v78 = vmul.f32 %v70, %v70
      %v79 = vadd.f32 %v77, 1e-06
      %v80 = vadd.f32 %v78, 1e-06
      %v81 = vrsqrt.pop %v79
      %v82 = vmul.f32 %v79, %v81
      %vm83 = vcmp.eq.f32.partialorder %v79, inf
      %v84 = vsel %vm83, %v79, %v82
      %vm85 = vcmp.eq.f32.partialorder %v79, 0.0
      %v86 = vand.u32 %v79, 2147483648
      %v87 = vsel %vm85, %v86, %v84
      %v88 = vrsqrt.pop %v80
      %v89 = vmul.f32 %v80, %v88
      %vm90 = vcmp.eq.f32.partialorder %v80, inf
      %v91 = vsel %vm90, %v80, %v89
      %vm92 = vcmp.eq.f32.partialorder %v80, 0.0
      %v93 = vand.u32 %v80, 2147483648
      %v94 = vsel %vm92, %v93, %v91
      %v95 = vadd.f32 %v87, %v94
      %v96 = vld [vmem:[#allocation7] sm:$0xff]
      %v97 = vadd.f32 %v96, %v95
      %98 = vst [vmem:[#allocation7] sm:$0xff] %v97
    $region25: #{tpu_custom_call.1} parent=1 // pred_fallthru
      _
    // Predicated region
    $region26: #{tpu_custom_call.1} parent=1 // pred_check
      %p99 = pneg %p72
    $region27: #{tpu_custom_call.1} parent=1 // pred_check_branch
      %101 = sbr.rel (%p99) target = $region29
    $region28: #{tpu_custom_call.1} parent=1 // pred_region
      %v102 = vlaneseq
      %v103 = vshrl.u32 %v102, 7
      %v104 = vadd.s32 %v103, 8
      %v105 = vlaneseq
      %v106 = vand.u32 %v105, 127
      %s107 = smul.u32 %s71, 2048
      %v108 = vmul.u32 %v103, 128
      %v109 = vmul.u32 %v104, 128
      %v110 = vstv %s107
      %v111 = vadd.s32 %v110, %v108
      %v112 = vadd.s32 %v110, %v109
      %v113 = vadd.s32 %v111, %v106
      %v114 = vadd.s32 %v112, %v106
      %vm115 = vcmp.lt.s32.totalorder %v113, 2048
      %vm116 = vcmp.lt.s32.totalorder %v114, 2048
      %v117 = vsel %vm115, %v69, 0.0
      %v118 = vsel %vm116, %v70, 0.0
      %v119 = vmul.f32 %v117, %v117
      %v120 = vmul.f32 %v118, %v118
      %v121 = vadd.f32 %v119, 1e-06
      %v122 = vadd.f32 %v120, 1e-06
      %v123 = vrsqrt.pop %v121
      %v124 = vmul.f32 %v121, %v123
      %vm125 = vcmp.eq.f32.partialorder %v121, inf
      %v126 = vsel %vm125, %v121, %v124
      %vm127 = vcmp.eq.f32.partialorder %v121, 0.0
      %v128 = vand.u32 %v121, 2147483648
      %v129 = vsel %vm127, %v128, %v126
      %v130 = vrsqrt.pop %v122
      %v131 = vmul.f32 %v122, %v130
      %vm132 = vcmp.eq.f32.partialorder %v122, inf
      %v133 = vsel %vm132, %v122, %v131
      %vm134 = vcmp.eq.f32.partialorder %v122, 0.0
      %v135 = vand.u32 %v122, 2147483648
      %v136 = vsel %vm134, %v135, %v133
      %v137 = vsel %vm115, %v129, 0.0
      %v138 = vsel %vm116, %v136, 0.0
      %v139 = vadd.f32 %v137, %v138
      %v140 = vld [vmem:[#allocation7] sm:$0xff]
      %v141 = vadd.f32 %v140, %v139
      %142 = vst [vmem:[#allocation7] sm:$0xff] %v141
    $region29: #{tpu_custom_call.1} parent=1 // pred_fallthru
      _
    // Predicated region
    $region30: #{tpu_custom_call.1} parent=1 // pred_check
      _
    $region31: #{tpu_custom_call.1} parent=1 // pred_check_branch
      %144 = sbr.rel (0) target = $region33
    $region32: #{tpu_custom_call.1} parent=1 // pred_region
      %s146 = ssub.s32 128, 128
      %147 = vsyncadd [#allocation4], %s146
      %s149 = sshll.u32 [#allocation7], 4
      %s150 = int_to_ptr.vmem [resolvable:$true] %s149
      %152 = dma.vmem_to_hbm [thread:$0]  %s150, 128, %s2, [#allocation4]
    $region33: #{tpu_custom_call.1} parent=1 // pred_fallthru
      _
    // Predicated region
    $region34: #{tpu_custom_call.1} parent=1 // pred_check
      _
    $region35: #{tpu_custom_call.1} parent=1 // pred_check_branch
      %154 = sbr.rel (0) target = $region37
    $region36: #{tpu_custom_call.1} parent=1 // pred_region
      %155 = dma.done [#allocation4], 128
    $region37: #{tpu_custom_call.1} parent=1 // pred_fallthru
      _
    %156 = vsyncpa [#allocation3], 1
    %157 = vsyncpa [#allocation6], 1
    %158 = vsyncpa [#allocation4], 1

</llo_original>
